<compile_context>
chip_gen: v7x
topology: tpu7x:2x2x1
jax: 0.10.0
libtpu: 0.0.40
codegen_flags: <defaults>
</compile_context>

<pallas_src>
import jax
import jax.numpy as jnp
from jax import lax
from jax.experimental import pallas as pl
from jax.experimental.pallas import tpu as pltpu

LN_EPS = 1e-5  # PyTorch nn.LayerNorm default


def _sigmoid(h):
    """sigmoid(h) == 0.5*tanh(0.5*h) + 0.5 : single EUP push (vs exp + recip)."""
    return 0.5 * jnp.tanh(0.5 * h) + 0.5


def _layernorm_1pass(h, gamma, beta):
    """LayerNorm over the last dim, single-pass variance, all f32.

    Inputs are sigmoid outputs in (0,1), so E[h^2]-mean^2 is benign; the
    max(.,0) clamp + eps guard against cancellation anyway.
    """
    n = h.shape[-1]
    inv_n = 1.0 / n
    s1 = jnp.sum(h, axis=-1, keepdims=True)
    s2 = jnp.sum(h * h, axis=-1, keepdims=True)
    mean = s1 * inv_n
    var = jnp.maximum(s2 * inv_n - mean * mean, 0.0)
    return (h - mean) * lax.rsqrt(var + LN_EPS) * gamma + beta


def mlp2_kernel(x_ref, w1_ref, w2_ref, vec_ref, o_ref):
    """x_ref: (S, D) f32;  w1_ref: (D, H) bf16;  w2_ref: (H, H//2) bf16;
    vec_ref: (8, H) f32 slab
        row 0: b1      row 1: gamma1   row 2: beta1
        row 3: b2                (first H//2 cols)
        row 4: gamma2 * w_out    (first H//2 cols)   [folded at pack time]
        row 5: dot(beta2, w_out) + b_out  at [5, 0]  [folded at pack time]
    o_ref: (1, S) f32   (lane-dense output row)
    """
    half = w2_ref.shape[1]

    b1 = vec_ref[0:1, :]
    g1 = vec_ref[1:2, :]
    be1 = vec_ref[2:3, :]
    b2 = vec_ref[3:4, :half]
    g2w = vec_ref[4:5, :half]          # (1, half) folded gamma2 * w_out
    c = vec_ref[5:6, 0:1]              # (1, 1) folded beta2.w_out + b_out

    x = x_ref[...]

    # fc1 -> sigmoid -> ln1  (bf16 MXU operands, f32 accumulate + elementwise)
    h1 = jnp.dot(x.astype(jnp.bfloat16), w1_ref[...],
                 preferred_element_type=jnp.float32) + b1
    h1 = _layernorm_1pass(_sigmoid(h1), g1, be1)

    # fc2 -> sigmoid -> ln2 (normalization only; affine folded into g2w / c)
    h2 = jnp.dot(h1.astype(jnp.bfloat16), w2_ref[...],
                 preferred_element_type=jnp.float32) + b2
    h2 = _sigmoid(h2)
    inv_h = 1.0 / half
    s1 = jnp.sum(h2, axis=-1, keepdims=True)
    s2 = jnp.sum(h2 * h2, axis=-1, keepdims=True)
    mean = s1 * inv_h
    var = jnp.maximum(s2 * inv_h - mean * mean, 0.0)
    norm = (h2 - mean) * lax.rsqrt(var + LN_EPS)

    # Output projection, lane-dense: (1, half) x (S, half) -> (1, S), bf16 MXU.
    out_row = lax.dot_general(
        g2w.astype(jnp.bfloat16), norm.astype(jnp.bfloat16),
        (((1,), (1,)), ((), ())),
        preferred_element_type=jnp.float32) + c
    o_ref[...] = out_row.astype(o_ref.dtype)


def _call_gridless(x, w1_t, w2_t, vec):
    """Small path: no grid, whole arrays resident in VMEM, no pipeline overhead."""
    n = x.shape[0]
    vspec = pl.BlockSpec(memory_space=pltpu.MemorySpace.VMEM)
    out = pl.pallas_call(
        mlp2_kernel,
        in_specs=[vspec, vspec, vspec, vspec],
        out_specs=vspec,
        out_shape=jax.ShapeDtypeStruct((1, n), jnp.float32),
    )(x, w1_t, w2_t, vec)
    return out.reshape(n, 1)


def _call_gridded(x, w1_t, w2_t, vec, row_tile):
    """Batched path: grid over row tiles, weights pinned to block 0 (resident).

    Output is a lane-dense (num_tiles, 1, row_tile) slab; caller reshapes.
    """
    n, d = x.shape
    hidden = w1_t.shape[1]
    half = w2_t.shape[1]
    num_tiles = n // row_tile
    return pl.pallas_call(
        mlp2_kernel,
        grid=(num_tiles,),
        in_specs=[
            pl.BlockSpec((row_tile, d), lambda i: (i, 0)),
            pl.BlockSpec((d, hidden), lambda i: (0, 0)),
            pl.BlockSpec((hidden, half), lambda i: (0, 0)),
            pl.BlockSpec((8, hidden), lambda i: (0, 0)),
        ],
        out_specs=pl.BlockSpec((None, 1, row_tile), lambda i: (i, 0, 0)),
        out_shape=jax.ShapeDtypeStruct((num_tiles, 1, row_tile), jnp.float32),
        compiler_params=pltpu.CompilerParams(
            dimension_semantics=("parallel",)),
    )(x, w1_t, w2_t, vec)


def mlp2_fixed_hidden_sigmoid(x, packed, row_tile=1024, small_cutoff=256):
    """x: (N, input_dim) f32. packed: output of pack_params(). Returns (N, 1)."""
    w1_t, w2_t, vec = packed
    n = x.shape[0]
    if n <= small_cutoff:
        return _call_gridless(x, w1_t, w2_t, vec)
    # Cap the row tile (multiple of 128) so there are always >= 2 grid steps:
    # on v7x the "parallel" grid axis is sharded across the 2 TensorCores.
    rt = min(row_tile, max(128, ((n // 2) // 128) * 128))
    pad = (-n) % rt
    xp = jnp.pad(x, ((0, pad), (0, 0))) if pad else x
    out = _call_gridded(xp, w1_t, w2_t, vec, rt)
    out = out.reshape(-1, 1)
    return out[:n] if pad else out


def init_params(key, input_dim, hidden_dim):
    """PyTorch-default init for the Linear / LayerNorm parameters."""
    half = hidden_dim // 2
    ks = jax.random.split(key, 3)

    def lin(k, fan_in, fan_out):
        kw, kb = jax.random.split(k)
        bound = 1.0 / jnp.sqrt(fan_in)
        w = jax.random.uniform(kw, (fan_out, fan_in), jnp.float32, -bound, bound)
        b = jax.random.uniform(kb, (fan_out,), jnp.float32, -bound, bound)
        return w, b

    w1, b1 = lin(ks[0], input_dim, hidden_dim)
    w2, b2 = lin(ks[1], hidden_dim, half)
    wout, bout = lin(ks[2], half, 1)      # see TODO(synk) at top of file
    g1 = jnp.ones((hidden_dim,), jnp.float32)
    be1 = jnp.zeros((hidden_dim,), jnp.float32)
    g2 = jnp.ones((half,), jnp.float32)
    be2 = jnp.zeros((half,), jnp.float32)
    return (w1, b1, g1, be1, w2, b2, g2, be2, wout, bout)


def pack_params(params, hidden_dim):
    """One-time packing: (in,out) bf16 weight slabs + one f32 vector slab.

    LN2's affine and the output layer are folded here:
        g2w = gamma2 * w_out
        c   = dot(beta2, w_out) + b_out
    so the kernel only normalizes h2 and contracts against g2w.
    """
    w1, b1, g1, be1, w2, b2, g2, be2, wout, bout = params
    half = hidden_dim // 2
    w1_t = jnp.asarray(w1.T, jnp.bfloat16)   # (input_dim, hidden)
    w2_t = jnp.asarray(w2.T, jnp.bfloat16)   # (hidden, half)
    g2w = g2 * wout[0]
    c = jnp.dot(be2, wout[0]) + bout[0]
    vec = jnp.zeros((8, hidden_dim), jnp.float32)
    vec = vec.at[0, :].set(b1)
    vec = vec.at[1, :].set(g1)
    vec = vec.at[2, :].set(be1)
    vec = vec.at[3, :half].set(b2)
    vec = vec.at[4, :half].set(g2w)
    vec = vec.at[5, 0].set(c)
    return w1_t, w2_t, vec


def _ln_ref(h, gamma, beta):
    mean = jnp.mean(h, axis=-1, keepdims=True)
    var = jnp.mean((h - mean) ** 2, axis=-1, keepdims=True)
    return (h - mean) * lax.rsqrt(var + LN_EPS) * gamma + beta


def reference_forward(x, params, matmul_dtype=jnp.float32):
    """Pure-JAX reference. matmul_dtype=bfloat16 mirrors the kernel's MXU casts."""
    w1, b1, g1, be1, w2, b2, g2, be2, wout, bout = params
    h1 = jnp.dot(x.astype(matmul_dtype), w1.T.astype(matmul_dtype),
                 preferred_element_type=jnp.float32) + b1
    h1 = _ln_ref(jax.nn.sigmoid(h1), g1, be1)
    h2 = jnp.dot(h1.astype(matmul_dtype), w2.T.astype(matmul_dtype),
                 preferred_element_type=jnp.float32) + b2
    h2 = _ln_ref(jax.nn.sigmoid(h2), g2, be2)
    return jnp.dot(h2, wout.T, preferred_element_type=jnp.float32) + bout


if __name__ == "__main__":
    INPUT_DIM = 128
    STACKED_DIM = 8
    HIDDEN_DIM = 512   # module default

    key = jax.random.PRNGKey(0)
    kx, kp, kb, kc = jax.random.split(key, 4)
    params = init_params(kp, INPUT_DIM, HIDDEN_DIM)
    packed = pack_params(params, HIDDEN_DIM)

    fwd = jax.jit(mlp2_fixed_hidden_sigmoid)

    # --- single stacked instance (gridless path) ---
    x = jax.random.normal(kx, (STACKED_DIM, INPUT_DIM), jnp.float32)
    out = jax.block_until_ready(fwd(x, packed))
    assert out.shape == (STACKED_DIM, 1), out.shape
    ref_bf16 = reference_forward(x, params, matmul_dtype=jnp.bfloat16)
    assert jnp.allclose(out, ref_bf16, atol=1e-2, rtol=1e-2), (out, ref_bf16)
    ref_f32 = reference_forward(x, params, matmul_dtype=jnp.float32)
    assert float(jnp.max(jnp.abs(out - ref_f32))) < 0.1

    # --- batched path (grid over row tiles, lane-dense output, >= 2 steps) ---
    xb = jax.random.normal(kb, (64 * STACKED_DIM, INPUT_DIM), jnp.float32)
    outb = jax.block_until_ready(fwd(xb, packed))
    assert outb.shape == (64 * STACKED_DIM, 1), outb.shape
    refb = reference_forward(xb, params, matmul_dtype=jnp.bfloat16)
    assert jnp.allclose(outb, refb, atol=1e-2, rtol=1e-2)

    # --- batched path with ragged N (exercises padding + tile-cap logic) ---
    xc = jax.random.normal(kc, (300, INPUT_DIM), jnp.float32)
    outc = jax.block_until_ready(fwd(xc, packed))
    assert outc.shape == (300, 1), outc.shape
    refc = reference_forward(xc, params, matmul_dtype=jnp.bfloat16)
    assert jnp.allclose(outc, refc, atol=1e-2, rtol=1e-2)

    print("KERNEL_OK")
</pallas_src>

<mosaic_0001>
module attributes {stable_mosaic.version = 11 : i64} {
  func.func @mlp2_kernel(%arg0: memref<8x128xf32, #tpu.memory_space<vmem>>, %arg1: memref<128x512xbf16, #tpu.memory_space<vmem>>, %arg2: memref<512x256xbf16, #tpu.memory_space<vmem>>, %arg3: memref<8x512xf32, #tpu.memory_space<vmem>>, %arg4: memref<1x8xf32, #tpu.memory_space<vmem>>) attributes {dimension_semantics = [], scalar_prefetch = 0 : i64, scratch_operands = 0 : i64, tpu.core_type = #tpu.core_type<tc>} {
    %c0 = arith.constant 0 : index
    %c0_0 = arith.constant 0 : index
    %0 = vector.load %arg3[%c0, %c0_0] : memref<8x512xf32, #tpu.memory_space<vmem>>, vector<1x512xf32>
    %c1 = arith.constant 1 : index
    %c0_1 = arith.constant 0 : index
    %1 = vector.load %arg3[%c1, %c0_1] : memref<8x512xf32, #tpu.memory_space<vmem>>, vector<1x512xf32>
    %c2 = arith.constant 2 : index
    %c0_2 = arith.constant 0 : index
    %2 = vector.load %arg3[%c2, %c0_2] : memref<8x512xf32, #tpu.memory_space<vmem>>, vector<1x512xf32>
    %c3 = arith.constant 3 : index
    %c0_3 = arith.constant 0 : index
    %3 = vector.load %arg3[%c3, %c0_3] : memref<8x512xf32, #tpu.memory_space<vmem>>, vector<1x256xf32>
    %c4 = arith.constant 4 : index
    %c0_4 = arith.constant 0 : index
    %4 = vector.load %arg3[%c4, %c0_4] : memref<8x512xf32, #tpu.memory_space<vmem>>, vector<1x256xf32>
    %c5 = arith.constant 5 : index
    %c0_5 = arith.constant 0 : index
    %5 = vector.load %arg3[%c5, %c0_5] : memref<8x512xf32, #tpu.memory_space<vmem>>, vector<1x1xf32>
    %c0_6 = arith.constant 0 : index
    %c0_7 = arith.constant 0 : index
    %6 = vector.load %arg0[%c0_6, %c0_7] : memref<8x128xf32, #tpu.memory_space<vmem>>, vector<8x128xf32>
    %7 = arith.truncf %6 : vector<8x128xf32> to vector<8x128xbf16>
    %c0_8 = arith.constant 0 : index
    %c0_9 = arith.constant 0 : index
    %8 = vector.load %arg1[%c0_8, %c0_9] : memref<128x512xbf16, #tpu.memory_space<vmem>>, vector<128x512xbf16>
    %cst = arith.constant dense<0.000000e+00> : vector<8x512xf32>
    %9 = tpu.matmul %7, %8, %cst {dimension_numbers = #tpu.dot_dimension_numbers<[1], [0], [0], [1], [0, 0, 1, 1], [], []>} : vector<8x128xbf16>, vector<128x512xbf16>, vector<8x512xf32> -> vector<8x512xf32>
    %10 = vector.broadcast %0 : vector<1x512xf32> to vector<8x512xf32>
    %11 = arith.addf %9, %10 : vector<8x512xf32>
    %cst_10 = arith.constant 5.000000e-01 : f32
    %12 = vector.broadcast %cst_10 : f32 to vector<8x512xf32>
    %13 = arith.mulf %12, %11 : vector<8x512xf32>
    %14 = math.tanh %13 : vector<8x512xf32>
    %cst_11 = arith.constant 5.000000e-01 : f32
    %15 = vector.broadcast %cst_11 : f32 to vector<8x512xf32>
    %16 = arith.mulf %15, %14 : vector<8x512xf32>
    %cst_12 = arith.constant 5.000000e-01 : f32
    %17 = vector.broadcast %cst_12 : f32 to vector<8x512xf32>
    %18 = arith.addf %16, %17 : vector<8x512xf32>
    %cst_13 = arith.constant dense<0.000000e+00> : vector<8xf32>
    %19 = vector.multi_reduction <add>, %18, %cst_13 [1] : vector<8x512xf32> to vector<8xf32>
    %20 = vector.shape_cast %19 : vector<8xf32> to vector<8x1xf32>
    %21 = arith.mulf %18, %18 : vector<8x512xf32>
    %cst_14 = arith.constant dense<0.000000e+00> : vector<8xf32>
    %22 = vector.multi_reduction <add>, %21, %cst_14 [1] : vector<8x512xf32> to vector<8xf32>
    %23 = vector.shape_cast %22 : vector<8xf32> to vector<8x1xf32>
    %cst_15 = arith.constant 0.001953125 : f32
    %24 = vector.broadcast %cst_15 : f32 to vector<8x1xf32>
    %25 = arith.mulf %20, %24 : vector<8x1xf32>
    %cst_16 = arith.constant 0.001953125 : f32
    %26 = vector.broadcast %cst_16 : f32 to vector<8x1xf32>
    %27 = arith.mulf %23, %26 : vector<8x1xf32>
    %28 = arith.mulf %25, %25 : vector<8x1xf32>
    %29 = arith.subf %27, %28 : vector<8x1xf32>
    %cst_17 = arith.constant 0.000000e+00 : f32
    %30 = vector.broadcast %cst_17 : f32 to vector<8x1xf32>
    %31 = arith.maximumf %29, %30 : vector<8x1xf32>
    %32 = vector.broadcast %25 : vector<8x1xf32> to vector<8x512xf32>
    %33 = arith.subf %18, %32 : vector<8x512xf32>
    %cst_18 = arith.constant 9.99999974E-6 : f32
    %34 = vector.broadcast %cst_18 : f32 to vector<8x1xf32>
    %35 = arith.addf %31, %34 : vector<8x1xf32>
    %36 = math.rsqrt %35 : vector<8x1xf32>
    %37 = vector.broadcast %36 : vector<8x1xf32> to vector<8x512xf32>
    %38 = arith.mulf %33, %37 : vector<8x512xf32>
    %39 = vector.broadcast %1 : vector<1x512xf32> to vector<8x512xf32>
    %40 = arith.mulf %38, %39 : vector<8x512xf32>
    %41 = vector.broadcast %2 : vector<1x512xf32> to vector<8x512xf32>
    %42 = arith.addf %40, %41 : vector<8x512xf32>
    %43 = arith.truncf %42 : vector<8x512xf32> to vector<8x512xbf16>
    %c0_19 = arith.constant 0 : index
    %c0_20 = arith.constant 0 : index
    %44 = vector.load %arg2[%c0_19, %c0_20] : memref<512x256xbf16, #tpu.memory_space<vmem>>, vector<512x256xbf16>
    %cst_21 = arith.constant dense<0.000000e+00> : vector<8x256xf32>
    %45 = tpu.matmul %43, %44, %cst_21 {dimension_numbers = #tpu.dot_dimension_numbers<[1], [0], [0], [1], [0, 0, 1, 1], [], []>} : vector<8x512xbf16>, vector<512x256xbf16>, vector<8x256xf32> -> vector<8x256xf32>
    %46 = vector.broadcast %3 : vector<1x256xf32> to vector<8x256xf32>
    %47 = arith.addf %45, %46 : vector<8x256xf32>
    %cst_22 = arith.constant 5.000000e-01 : f32
    %48 = vector.broadcast %cst_22 : f32 to vector<8x256xf32>
    %49 = arith.mulf %48, %47 : vector<8x256xf32>
    %50 = math.tanh %49 : vector<8x256xf32>
    %cst_23 = arith.constant 5.000000e-01 : f32
    %51 = vector.broadcast %cst_23 : f32 to vector<8x256xf32>
    %52 = arith.mulf %51, %50 : vector<8x256xf32>
    %cst_24 = arith.constant 5.000000e-01 : f32
    %53 = vector.broadcast %cst_24 : f32 to vector<8x256xf32>
    %54 = arith.addf %52, %53 : vector<8x256xf32>
    %cst_25 = arith.constant dense<0.000000e+00> : vector<8xf32>
    %55 = vector.multi_reduction <add>, %54, %cst_25 [1] : vector<8x256xf32> to vector<8xf32>
    %56 = vector.shape_cast %55 : vector<8xf32> to vector<8x1xf32>
    %57 = arith.mulf %54, %54 : vector<8x256xf32>
    %cst_26 = arith.constant dense<0.000000e+00> : vector<8xf32>
    %58 = vector.multi_reduction <add>, %57, %cst_26 [1] : vector<8x256xf32> to vector<8xf32>
    %59 = vector.shape_cast %58 : vector<8xf32> to vector<8x1xf32>
    %cst_27 = arith.constant 3.906250e-03 : f32
    %60 = vector.broadcast %cst_27 : f32 to vector<8x1xf32>
    %61 = arith.mulf %56, %60 : vector<8x1xf32>
    %cst_28 = arith.constant 3.906250e-03 : f32
    %62 = vector.broadcast %cst_28 : f32 to vector<8x1xf32>
    %63 = arith.mulf %59, %62 : vector<8x1xf32>
    %64 = arith.mulf %61, %61 : vector<8x1xf32>
    %65 = arith.subf %63, %64 : vector<8x1xf32>
    %cst_29 = arith.constant 0.000000e+00 : f32
    %66 = vector.broadcast %cst_29 : f32 to vector<8x1xf32>
    %67 = arith.maximumf %65, %66 : vector<8x1xf32>
    %68 = vector.broadcast %61 : vector<8x1xf32> to vector<8x256xf32>
    %69 = arith.subf %54, %68 : vector<8x256xf32>
    %cst_30 = arith.constant 9.99999974E-6 : f32
    %70 = vector.broadcast %cst_30 : f32 to vector<8x1xf32>
    %71 = arith.addf %67, %70 : vector<8x1xf32>
    %72 = math.rsqrt %71 : vector<8x1xf32>
    %73 = vector.broadcast %72 : vector<8x1xf32> to vector<8x256xf32>
    %74 = arith.mulf %69, %73 : vector<8x256xf32>
    %75 = arith.truncf %4 : vector<1x256xf32> to vector<1x256xbf16>
    %76 = arith.truncf %74 : vector<8x256xf32> to vector<8x256xbf16>
    %cst_31 = arith.constant dense<0.000000e+00> : vector<1x8xf32>
    %77 = tpu.matmul %75, %76, %cst_31 {dimension_numbers = #tpu.dot_dimension_numbers<[1], [1], [0], [0], [0, 0, 1, 0], [], []>} : vector<1x256xbf16>, vector<8x256xbf16>, vector<1x8xf32> -> vector<1x8xf32>
    %78 = vector.broadcast %5 : vector<1x1xf32> to vector<1x8xf32>
    %79 = arith.addf %77, %78 : vector<1x8xf32>
    %c0_32 = arith.constant 0 : index
    %c0_33 = arith.constant 0 : index
    %80 = vector.load %arg4[%c0_32, %c0_33] : memref<1x8xf32, #tpu.memory_space<vmem>>, vector<1x8xf32>
    tpu.vector_store %arg4[%c0_32, %c0_33], %79 {strides = array<i32>} : memref<1x8xf32, #tpu.memory_space<vmem>>, vector<1x8xf32>,
    return
  }
}

</mosaic_0001>

<llo_original>
// kernel: mlp2_fixed_hidden_sigmoid.1
$region0: #{mlp2_fixed_hidden_sigmoid.1}
  #allocation0 [shape = 'u32[]', space=smem, size = 0x4, offset = 0x4, fixed_abs, tag = 'smem constant byte address 0x4 - core index']
  #allocation1 [shape = 'u32[144,128]{1,0:T(1,128)}', space=vmem, size = 0x12000, scoped, tag = 'internal scratch']
  %s0 = inlined_call_operand.hbm [shape: f32[8,128], index: 0, kind: input, shape index: {}]
  %s1 = inlined_call_operand.hbm [shape: bf16[128,512], index: 1, kind: input, shape index: {}]
  %s2 = inlined_call_operand.hbm [shape: bf16[512,256], index: 2, kind: input, shape index: {}]
  %s3 = inlined_call_operand.hbm [shape: f32[8,512], index: 3, kind: input, shape index: {}]
  %s4 = inlined_call_operand.hbm [shape: f32[1,8], index: 4, kind: output, shape index: {}]
  %s5 = sld [smem:[#allocation0]]
  $region42: #{mlp2_fixed_hidden_sigmoid.1} parent=0
    _
  %s7 = ssub.s32 1, %s5
  %s8 = scalar_select 0, %s7, %s5
  $region1: #{mlp2_fixed_hidden_sigmoid.1} parent=0
    #allocation2 [shape = 'u8[4096]{0}', space=vmem, size = 0x1000, scoped, tag = 'input window, operand 0, single buffered']
    #allocation3 [shape = 's32[1]{0}', space=sflag, size = 0x4, scoped, tag = 'scoped memory for mlp2_fixed_hidden_sigmoid.1']
    #allocation4 [shape = 's32[1]{0}', space=sflag, size = 0x4, scoped, tag = 'scoped memory for mlp2_fixed_hidden_sigmoid.1']
    #allocation5 [shape = 'u8[131072]{0}', space=vmem, size = 0x20000, scoped, tag = 'input window, operand 1, single buffered']
    #allocation6 [shape = 's32[1]{0}', space=sflag, size = 0x4, scoped, tag = 'scoped memory for mlp2_fixed_hidden_sigmoid.1']
    #allocation7 [shape = 'u8[262144]{0}', space=vmem, size = 0x40000, scoped, tag = 'input window, operand 2, single buffered']
    #allocation8 [shape = 'u8[16384]{0}', space=vmem, size = 0x4000, scoped, tag = 'input window, operand 3, single buffered']
    #allocation9 [shape = 's32[1]{0}', space=sflag, size = 0x4, scoped, tag = 'scoped memory for mlp2_fixed_hidden_sigmoid.1']
    #allocation10 [shape = 'u8[512]{0}', space=vmem, size = 0x400, scoped, tag = 'output window, operand 0, single buffered']
    %9 = vsyncpa [#allocation3], 0
    %10 = vsyncpa [#allocation6], 0
    %11 = vsyncpa [#allocation9], 0
    %12 = vsyncpa [#allocation4], 0
    // Predicated region
    $region2: #{mlp2_fixed_hidden_sigmoid.1} parent=1 // pred_check
      _
    $region3: #{mlp2_fixed_hidden_sigmoid.1} parent=1 // pred_check_branch
      %14 = sbr.rel (0) target = $region5
    $region4: #{mlp2_fixed_hidden_sigmoid.1} parent=1 // pred_region
      %s16 = ssub.s32 128, 128
      %17 = vsyncadd [#allocation3], %s16
      %s19 = sshll.u32 [#allocation2], 4
      %s20 = int_to_ptr.vmem [resolvable:$true] %s19
      %22 = dma.hbm_to_vmem [thread:$0]  %s0, 128, %s20, [#allocation3]
    $region5: #{mlp2_fixed_hidden_sigmoid.1} parent=1 // pred_fallthru
      _
    // Predicated region
    $region6: #{mlp2_fixed_hidden_sigmoid.1} parent=1 // pred_check
      _
    $region7: #{mlp2_fixed_hidden_sigmoid.1} parent=1 // pred_check_branch
      %24 = sbr.rel (0) target = $region9
    $region8: #{mlp2_fixed_hidden_sigmoid.1} parent=1 // pred_region
      %s26 = ssub.s32 4096, 4096
      %27 = vsyncadd [#allocation6], %s26
      %s28 = sshll.u32 [#allocation5], 4
      %s29 = int_to_ptr.vmem [resolvable:$true] %s28
      %34 = dma.hbm_to_vmem [thread:$0]  %s1, 4096, %s29, [#allocation6], 256, 256, 16
    $region9: #{mlp2_fixed_hidden_sigmoid.1} parent=1 // pred_fallthru
      _
    // Predicated region
    $region10: #{mlp2_fixed_hidden_sigmoid.1} parent=1 // pred_check
      _
    $region11: #{mlp2_fixed_hidden_sigmoid.1} parent=1 // pred_check_branch
      %36 = sbr.rel (0) target = $region13
    $region12: #{mlp2_fixed_hidden_sigmoid.1} parent=1 // pred_region
      %s38 = ssub.s32 8192, 8192
      %39 = vsyncadd [#allocation6], %s38
      %s40 = sshll.u32 [#allocation7], 4
      %s41 = int_to_ptr.vmem [resolvable:$true] %s40
      %46 = dma.hbm_to_vmem [thread:$0]  %s2, 8192, %s41, [#allocation6], 128, 128, 8
    $region13: #{mlp2_fixed_hidden_sigmoid.1} parent=1 // pred_fallthru
      _
    // Predicated region
    $region14: #{mlp2_fixed_hidden_sigmoid.1} parent=1 // pred_check
      _
    $region15: #{mlp2_fixed_hidden_sigmoid.1} parent=1 // pred_check_branch
      %48 = sbr.rel (0) target = $region17
    $region16: #{mlp2_fixed_hidden_sigmoid.1} parent=1 // pred_region
      %s50 = ssub.s32 512, 512
      %51 = vsyncadd [#allocation9], %s50
      %s53 = sshll.u32 [#allocation8], 4
      %s54 = int_to_ptr.vmem [resolvable:$true] %s53
      %56 = dma.hbm_to_vmem [thread:$0]  %s3, 512, %s54, [#allocation9]
    $region17: #{mlp2_fixed_hidden_sigmoid.1} parent=1 // pred_fallthru
      _
    // Predicated region
    $region18: #{mlp2_fixed_hidden_sigmoid.1} parent=1 // pred_check
      _
    $region19: #{mlp2_fixed_hidden_sigmoid.1} parent=1 // pred_check_branch
      %58 = sbr.rel (0) target = $region21
    $region20: #{mlp2_fixed_hidden_sigmoid.1} parent=1 // pred_region
      %59 = dma.done [#allocation3], 128
    $region21: #{mlp2_fixed_hidden_sigmoid.1} parent=1 // pred_fallthru
      _
    // Predicated region
    $region22: #{mlp2_fixed_hidden_sigmoid.1} parent=1 // pred_check
      _
    $region23: #{mlp2_fixed_hidden_sigmoid.1} parent=1 // pred_check_branch
      %61 = sbr.rel (0) target = $region25
    $region24: #{mlp2_fixed_hidden_sigmoid.1} parent=1 // pred_region
      %62 = dma.done [#allocation6], 4096
    $region25: #{mlp2_fixed_hidden_sigmoid.1} parent=1 // pred_fallthru
      _
    // Predicated region
    $region26: #{mlp2_fixed_hidden_sigmoid.1} parent=1 // pred_check
      _
    $region27: #{mlp2_fixed_hidden_sigmoid.1} parent=1 // pred_check_branch
      %64 = sbr.rel (0) target = $region29
    $region28: #{mlp2_fixed_hidden_sigmoid.1} parent=1 // pred_region
      %65 = dma.done [#allocation6], 8192
    $region29: #{mlp2_fixed_hidden_sigmoid.1} parent=1 // pred_fallthru
      _
    // Predicated region
    $region30: #{mlp2_fixed_hidden_sigmoid.1} parent=1 // pred_check
      _
    $region31: #{mlp2_fixed_hidden_sigmoid.1} parent=1 // pred_check_branch
      %67 = sbr.rel (0) target = $region33
    $region32: #{mlp2_fixed_hidden_sigmoid.1} parent=1 // pred_region
      %68 = dma.done [#allocation9], 512
    $region33: #{mlp2_fixed_hidden_sigmoid.1} parent=1 // pred_fallthru
      _
    %v70 = vld [vmem:[#allocation8] ss:$8 sm:$0xf]
    %s71 = scalar_lea.vmem [#allocation8], 1
    %v72 = vld [vmem:[%s71] ss:$8 sm:$0xf]
    %s73 = scalar_lea.vmem [#allocation8], 2
    %v74 = vld [vmem:[%s73] ss:$8 sm:$0xf]
    %s75 = scalar_lea.vmem [#allocation8], 3
    %v76 = vld [vmem:[%s75] ss:$8 sm:$0x3]
    %s77 = scalar_lea.vmem [#allocation8], 4
    %v78 = vld [vmem:[%s77] ss:$8 sm:$0x3]
    %v79 = vld [vmem:[#allocation8 + $0x5] ss:$0 sm:$0xff]
    %v80 = vld [vmem:[#allocation2] sm:$0xff]
    %v81 = vpack.c.bf16 %v80, %v80
    %v82 = vld [vmem:[#allocation5] sm:$0xff]
    %v83 = vld [vmem:[#allocation5 + $0x8] sm:$0xff]
    %v84 = vld [vmem:[#allocation5 + $0x10] sm:$0xff]
    %v85 = vld [vmem:[#allocation5 + $0x18] sm:$0xff]
    %v86 = vld [vmem:[#allocation5 + $0x20] sm:$0xff]
    %v87 = vld [vmem:[#allocation5 + $0x28] sm:$0xff]
    %v88 = vld [vmem:[#allocation5 + $0x30] sm:$0xff]
    %v89 = vld [vmem:[#allocation5 + $0x38] sm:$0xff]
    %v90 = vld [vmem:[#allocation5 + $0x40] sm:$0xff]
    %v91 = vld [vmem:[#allocation5 + $0x48] sm:$0xff]
    %v92 = vld [vmem:[#allocation5 + $0x50] sm:$0xff]
    %v93 = vld [vmem:[#allocation5 + $0x58] sm:$0xff]
    %v94 = vld [vmem:[#allocation5 + $0x60] sm:$0xff]
    %v95 = vld [vmem:[#allocation5 + $0x68] sm:$0xff]
    %v96 = vld [vmem:[#allocation5 + $0x70] sm:$0xff]
    %v97 = vld [vmem:[#allocation5 + $0x78] sm:$0xff]
    %v98 = vld [vmem:[#allocation5 + $0x80] sm:$0xff]
    %v99 = vld [vmem:[#allocation5 + $0x88] sm:$0xff]
    %v100 = vld [vmem:[#allocation5 + $0x90] sm:$0xff]
    %v101 = vld [vmem:[#allocation5 + $0x98] sm:$0xff]
    %v102 = vld [vmem:[#allocation5 + $0xa0] sm:$0xff]
    %v103 = vld [vmem:[#allocation5 + $0xa8] sm:$0xff]
    %v104 = vld [vmem:[#allocation5 + $0xb0] sm:$0xff]
    %v105 = vld [vmem:[#allocation5 + $0xb8] sm:$0xff]
    %v106 = vld [vmem:[#allocation5 + $0xc0] sm:$0xff]
    %v107 = vld [vmem:[#allocation5 + $0xc8] sm:$0xff]
    %v108 = vld [vmem:[#allocation5 + $0xd0] sm:$0xff]
    %v109 = vld [vmem:[#allocation5 + $0xd8] sm:$0xff]
    %v110 = vld [vmem:[#allocation5 + $0xe0] sm:$0xff]
    %v111 = vld [vmem:[#allocation5 + $0xe8] sm:$0xff]
    %v112 = vld [vmem:[#allocation5 + $0xf0] sm:$0xff]
    %v113 = vld [vmem:[#allocation5 + $0xf8] sm:$0xff]
    %v115 = vlaneseq
    %v116 = vshrl.u32 %v115, 7
    %v117 = vsub.s32 0, %v116
    %v118 = vrot.slane %v70, %v117
    %v119 = vlaneseq
    %v120 = vshrl.u32 %v119, 7
    %v121 = vsub.s32 1, %v120
    %v122 = vrot.slane %v70, %v121
    %v123 = vlaneseq
    %v124 = vshrl.u32 %v123, 7
    %v125 = vsub.s32 2, %v124
    %v126 = vrot.slane %v70, %v125
    %v127 = vlaneseq
    %v128 = vshrl.u32 %v127, 7
    %v129 = vsub.s32 3, %v128
    %v130 = vrot.slane %v70, %v129
    %v167 = vunpack.c.l.b16 %v82
    %v168 = vunpack.c.h.b16 %v82
    %v169 = vunpack.c.l.b16 %v83
    %v170 = vunpack.c.h.b16 %v83
    %v171 = vunpack.c.l.b16 %v84
    %v172 = vunpack.c.h.b16 %v84
    %v173 = vunpack.c.l.b16 %v85
    %v174 = vunpack.c.h.b16 %v85
    %v175 = vunpack.c.l.b16 %v86
    %v176 = vunpack.c.h.b16 %v86
    %v177 = vunpack.c.l.b16 %v87
    %v178 = vunpack.c.h.b16 %v87
    %v179 = vunpack.c.l.b16 %v88
    %v180 = vunpack.c.h.b16 %v88
    %v181 = vunpack.c.l.b16 %v89
    %v182 = vunpack.c.h.b16 %v89
    %v183 = vunpack.c.l.b16 %v90
    %v184 = vunpack.c.h.b16 %v90
    %v185 = vunpack.c.l.b16 %v91
    %v186 = vunpack.c.h.b16 %v91
    %v187 = vunpack.c.l.b16 %v92
    %v188 = vunpack.c.h.b16 %v92
    %v189 = vunpack.c.l.b16 %v93
    %v190 = vunpack.c.h.b16 %v93
    %v191 = vunpack.c.l.b16 %v94
    %v192 = vunpack.c.h.b16 %v94
    %v193 = vunpack.c.l.b16 %v95
    %v194 = vunpack.c.h.b16 %v95
    %v195 = vunpack.c.l.b16 %v96
    %v196 = vunpack.c.h.b16 %v96
    %v197 = vunpack.c.l.b16 %v97
    %v198 = vunpack.c.h.b16 %v97
    %v199 = vunpack.c.l.b16 %v98
    %v200 = vunpack.c.h.b16 %v98
    %v201 = vunpack.c.l.b16 %v99
    %v202 = vunpack.c.h.b16 %v99
    %v203 = vunpack.c.l.b16 %v100
    %v204 = vunpack.c.h.b16 %v100
    %v205 = vunpack.c.l.b16 %v101
    %v206 = vunpack.c.h.b16 %v101
    %v207 = vunpack.c.l.b16 %v102
    %v208 = vunpack.c.h.b16 %v102
    %v209 = vunpack.c.l.b16 %v103
    %v210 = vunpack.c.h.b16 %v103
    %v211 = vunpack.c.l.b16 %v104
    %v212 = vunpack.c.h.b16 %v104
    %v213 = vunpack.c.l.b16 %v105
    %v214 = vunpack.c.h.b16 %v105
    %v215 = vunpack.c.l.b16 %v106
    %v216 = vunpack.c.h.b16 %v106
    %v217 = vunpack.c.l.b16 %v107
    %v218 = vunpack.c.h.b16 %v107
    %v219 = vunpack.c.l.b16 %v108
    %v220 = vunpack.c.h.b16 %v108
    %v221 = vunpack.c.l.b16 %v109
    %v222 = vunpack.c.h.b16 %v109
    %v223 = vunpack.c.l.b16 %v110
    %v224 = vunpack.c.h.b16 %v110
    %v225 = vunpack.c.l.b16 %v111
    %v226 = vunpack.c.h.b16 %v111
    %v227 = vunpack.c.l.b16 %v112
    %v228 = vunpack.c.h.b16 %v112
    %v229 = vunpack.c.l.b16 %v113
    %v230 = vunpack.c.h.b16 %v113
    %v231 = vpack.c.b16 %v171, %v167
    %v232 = vpack.c.b16 %v172, %v168
    %v233 = vpack.c.b16 %v173, %v169
    %v234 = vpack.c.b16 %v174, %v170
    %v235 = vpack.c.b16 %v179, %v175
    %v236 = vpack.c.b16 %v180, %v176
    %v237 = vpack.c.b16 %v181, %v177
    %v238 = vpack.c.b16 %v182, %v178
    %v239 = vpack.c.b16 %v187, %v183
    %v240 = vpack.c.b16 %v188, %v184
    %v241 = vpack.c.b16 %v189, %v185
    %v242 = vpack.c.b16 %v190, %v186
    %v243 = vpack.c.b16 %v195, %v191
    %v244 = vpack.c.b16 %v196, %v192
    %v245 = vpack.c.b16 %v197, %v193
    %v246 = vpack.c.b16 %v198, %v194
    %v247 = vpack.c.b16 %v203, %v199
    %v248 = vpack.c.b16 %v204, %v200
    %v249 = vpack.c.b16 %v205, %v201
    %v250 = vpack.c.b16 %v206, %v202
    %v251 = vpack.c.b16 %v211, %v207
    %v252 = vpack.c.b16 %v212, %v208
    %v253 = vpack.c.b16 %v213, %v209
    %v254 = vpack.c.b16 %v214, %v210
    %v255 = vpack.c.b16 %v219, %v215
    %v256 = vpack.c.b16 %v220, %v216
    %v257 = vpack.c.b16 %v221, %v217
    %v258 = vpack.c.b16 %v222, %v218
    %v259 = vpack.c.b16 %v227, %v223
    %v260 = vpack.c.b16 %v228, %v224
    %v261 = vpack.c.b16 %v229, %v225
    %v262 = vpack.c.b16 %v230, %v226
    %295 = vmatprep.subr.bf16.mxu0 %v232
    %296 = vmatpush1.bf16.msra.mxu0 %v231
    %297 = vmatprep.subr.bf16.mxu0 %v236
    %298 = vmatpush1.bf16.msra.mxu0 %v235
    %299 = vmatprep.subr.bf16.mxu0 %v240
    %300 = vmatpush1.bf16.msra.mxu0 %v239
    %301 = vmatprep.subr.bf16.mxu0 %v244
    %302 = vmatpush1.bf16.msra.mxu0 %v243
    %303 = vmatprep.subr.bf16.mxu0 %v248
    %304 = vmatpush1.bf16.msra.mxu0 %v247
    %305 = vmatprep.subr.bf16.mxu0 %v252
    %306 = vmatpush1.bf16.msra.mxu0 %v251
    %307 = vmatprep.subr.bf16.mxu0 %v256
    %308 = vmatpush1.bf16.msra.mxu0 %v255
    %309 = vmatprep.subr.bf16.mxu0 %v260
    %310 = vmatpush1.bf16.msra.mxu0 %v259
    %311 = vmatprep.subr.bf16.mxu0 0
    %312 = vmatpush1.bf16.msra.mxu0 0
    %313 = vmatprep.subr.bf16.mxu0 0
    %314 = vmatpush1.bf16.msra.mxu0 0
    %315 = vmatprep.subr.bf16.mxu0 0
    %316 = vmatpush1.bf16.msra.mxu0 0
    %317 = vmatprep.subr.bf16.mxu0 0
    %318 = vmatpush1.bf16.msra.mxu0 0
    %319 = vmatprep.subr.bf16.mxu0 0
    %320 = vmatpush1.bf16.msra.mxu0 0
    %321 = vmatprep.subr.bf16.mxu0 0
    %322 = vmatpush1.bf16.msra.mxu0 0
    %323 = vmatprep.subr.bf16.mxu0 0
    %324 = vmatpush1.bf16.msra.mxu0 0
    %325 = vmatprep.subr.bf16.mxu0 0
    %326 = vmatpush1.bf16.msra.mxu0 0
    %327 = vmatprep.mubr.bf16.mxu0 0
    %328 = vmatmul.mubr.bf16.gmra.mrb[0].mxu0 %v81
    %v329 = vpop.f32.mrb[0].mxu0
    %v330 = vadd.f32 %v118, %v329
    %v331 = vpop.f32.mrb[0].mxu0
    %v332 = vadd.f32 %v122, %v331
    %v333 = vpop.f32.mrb[0].mxu0
    %v334 = vpop.f32.mrb[0].mxu0
    %335 = vdwg.mxu0
    %336 = vmatprep.subr.bf16.mxu0 %v234
    %337 = vmatpush1.bf16.msra.mxu0 %v233
    %338 = vmatprep.subr.bf16.mxu0 %v238
    %339 = vmatpush1.bf16.msra.mxu0 %v237
    %340 = vmatprep.subr.bf16.mxu0 %v242
    %341 = vmatpush1.bf16.msra.mxu0 %v241
    %342 = vmatprep.subr.bf16.mxu0 %v246
    %343 = vmatpush1.bf16.msra.mxu0 %v245
    %344 = vmatprep.subr.bf16.mxu0 %v250
    %345 = vmatpush1.bf16.msra.mxu0 %v249
    %346 = vmatprep.subr.bf16.mxu0 %v254
    %347 = vmatpush1.bf16.msra.mxu0 %v253
    %348 = vmatprep.subr.bf16.mxu0 %v258
    %349 = vmatpush1.bf16.msra.mxu0 %v257
    %350 = vmatprep.subr.bf16.mxu0 %v262
    %351 = vmatpush1.bf16.msra.mxu0 %v261
    %352 = vmatprep.subr.bf16.mxu0 0
    %353 = vmatpush1.bf16.msra.mxu0 0
    %354 = vmatprep.subr.bf16.mxu0 0
    %355 = vmatpush1.bf16.msra.mxu0 0
    %356 = vmatprep.subr.bf16.mxu0 0
    %357 = vmatpush1.bf16.msra.mxu0 0
    %358 = vmatprep.subr.bf16.mxu0 0
    %359 = vmatpush1.bf16.msra.mxu0 0
    %360 = vmatprep.subr.bf16.mxu0 0
    %361 = vmatpush1.bf16.msra.mxu0 0
    %362 = vmatprep.subr.bf16.mxu0 0
    %363 = vmatpush1.bf16.msra.mxu0 0
    %364 = vmatprep.subr.bf16.mxu0 0
    %365 = vmatpush1.bf16.msra.mxu0 0
    %366 = vmatprep.subr.bf16.mxu0 0
    %367 = vmatpush1.bf16.msra.mxu0 0
    %368 = vmatprep.mubr.bf16.mxu0 0
    %369 = vmatmul.mubr.bf16.gmra.mrb[0].mxu0 %v81
    %v370 = vpop.f32.mrb[0].mxu0
    %v371 = vadd.f32 %v126, %v370
    %v372 = vpop.f32.mrb[0].mxu0
    %v373 = vadd.f32 %v130, %v372
    %v374 = vpop.f32.mrb[0].mxu0
    %v375 = vpop.f32.mrb[0].mxu0
    %376 = vdwg.mxu0
    %v377 = vmul.f32 %v330, 0.5
    %v378 = vmul.f32 %v332, 0.5
    %v379 = vmul.f32 %v371, 0.5
    %v380 = vmul.f32 %v373, 0.5
    %v381 = vtanh.pop %v377
    %v382 = vtanh.pop %v378
    %v383 = vtanh.pop %v379
    %v384 = vtanh.pop %v380
    %v385 = vmul.f32 %v381, 0.5
    %v386 = vmul.f32 %v382, 0.5
    %v387 = vmul.f32 %v383, 0.5
    %v388 = vmul.f32 %v384, 0.5
    %v389 = vadd.f32 %v385, 0.5
    %v390 = vadd.f32 %v386, 0.5
    %v391 = vadd.f32 %v387, 0.5
    %v392 = vadd.f32 %v388, 0.5
    %v393 = vadd.f32 %v389, %v390
    %v394 = vadd.f32 %v393, %v391
    %v395 = vadd.f32 %v394, %v392
    %396 = vadd.xlane.f32.xlu0 %v395
    %v397 = vpop.xlane.xlu0 %396
    %v398 = vmul.f32 %v389, %v389
    %v399 = vmul.f32 %v390, %v390
    %v400 = vmul.f32 %v391, %v391
    %v401 = vmul.f32 %v392, %v392
    %v402 = vadd.f32 %v398, %v399
    %v403 = vadd.f32 %v402, %v400
    %v404 = vadd.f32 %v403, %v401
    %405 = vadd.xlane.f32.xlu0 %v404
    %v406 = vpop.xlane.xlu0 %405
    %v407 = vmul.f32 %v397, 0.001953125
    %v408 = vmul.f32 %v406, 0.001953125
    %v409 = vmul.f32 %v407, %v407
    %v410 = vsub.f32 %v408, %v409
    %v411 = vmax.f32 %v410, 0.0
    %v412 = vsub.f32 %v389, %v407
    %v413 = vsub.f32 %v390, %v407
    %v414 = vsub.f32 %v391, %v407
    %v415 = vsub.f32 %v392, %v407
    %v416 = vadd.f32 %v411, 1e-05
    %v417 = vrsqrt.pop %v416
    %v418 = vmul.f32 %v412, %v417
    %v419 = vmul.f32 %v413, %v417
    %v420 = vmul.f32 %v414, %v417
    %v421 = vmul.f32 %v415, %v417
    %v423 = vlaneseq
    %v424 = vshrl.u32 %v423, 7
    %v425 = vsub.s32 0, %v424
    %v426 = vrot.slane %v72, %v425
    %v427 = vlaneseq
    %v428 = vshrl.u32 %v427, 7
    %v429 = vsub.s32 1, %v428
    %v430 = vrot.slane %v72, %v429
    %v431 = vlaneseq
    %v432 = vshrl.u32 %v431, 7
    %v433 = vsub.s32 2, %v432
    %v434 = vrot.slane %v72, %v433
    %v435 = vlaneseq
    %v436 = vshrl.u32 %v435, 7
    %v437 = vsub.s32 3, %v436
    %v438 = vrot.slane %v72, %v437
    %v443 = vmul.f32 %v418, %v426
    %v444 = vmul.f32 %v419, %v430
    %v445 = vmul.f32 %v420, %v434
    %v446 = vmul.f32 %v421, %v438
    %v448 = vlaneseq
    %v449 = vshrl.u32 %v448, 7
    %v450 = vsub.s32 0, %v449
    %v451 = vrot.slane %v74, %v450
    %v452 = vlaneseq
    %v453 = vshrl.u32 %v452, 7
    %v454 = vsub.s32 1, %v453
    %v455 = vrot.slane %v74, %v454
    %v456 = vlaneseq
    %v457 = vshrl.u32 %v456, 7
    %v458 = vsub.s32 2, %v457
    %v459 = vrot.slane %v74, %v458
    %v460 = vlaneseq
    %v461 = vshrl.u32 %v460, 7
    %v462 = vsub.s32 3, %v461
    %v463 = vrot.slane %v74, %v462
    %v468 = vadd.f32 %v443, %v451
    %v469 = vadd.f32 %v444, %v455
    %v470 = vadd.f32 %v445, %v459
    %v471 = vadd.f32 %v446, %v463
    %v472 = vpack.c.bf16 %v468, %v468
    %v473 = vpack.c.bf16 %v469, %v469
    %v474 = vpack.c.bf16 %v470, %v470
    %v475 = vpack.c.bf16 %v471, %v471
    %v476 = vld [vmem:[#allocation7] sm:$0xff]
    %v477 = vld [vmem:[#allocation7 + $0x8] sm:$0xff]
    %v478 = vld [vmem:[#allocation7 + $0x10] sm:$0xff]
    %v479 = vld [vmem:[#allocation7 + $0x18] sm:$0xff]
    %v480 = vld [vmem:[#allocation7 + $0x20] sm:$0xff]
    %v481 = vld [vmem:[#allocation7 + $0x28] sm:$0xff]
    %v482 = vld [vmem:[#allocation7 + $0x30] sm:$0xff]
    %v483 = vld [vmem:[#allocation7 + $0x38] sm:$0xff]
    %v484 = vld [vmem:[#allocation7 + $0x40] sm:$0xff]
    %v485 = vld [vmem:[#allocation7 + $0x48] sm:$0xff]
    %v486 = vld [vmem:[#allocation7 + $0x50] sm:$0xff]
    %v487 = vld [vmem:[#allocation7 + $0x58] sm:$0xff]
    %v488 = vld [vmem:[#allocation7 + $0x60] sm:$0xff]
    %v489 = vld [vmem:[#allocation7 + $0x68] sm:$0xff]
    %v490 = vld [vmem:[#allocation7 + $0x70] sm:$0xff]
    %v491 = vld [vmem:[#allocation7 + $0x78] sm:$0xff]
    %v492 = vld [vmem:[#allocation7 + $0x80] sm:$0xff]
    %v493 = vld [vmem:[#allocation7 + $0x88] sm:$0xff]
    %v494 = vld [vmem:[#allocation7 + $0x90] sm:$0xff]
    %v495 = vld [vmem:[#allocation7 + $0x98] sm:$0xff]
    %v496 = vld [vmem:[#allocation7 + $0xa0] sm:$0xff]
    %v497 = vld [vmem:[#allocation7 + $0xa8] sm:$0xff]
    %v498 = vld [vmem:[#allocation7 + $0xb0] sm:$0xff]
    %v499 = vld [vmem:[#allocation7 + $0xb8] sm:$0xff]
    %v500 = vld [vmem:[#allocation7 + $0xc0] sm:$0xff]
    %v501 = vld [vmem:[#allocation7 + $0xc8] sm:$0xff]
    %v502 = vld [vmem:[#allocation7 + $0xd0] sm:$0xff]
    %v503 = vld [vmem:[#allocation7 + $0xd8] sm:$0xff]
    %v504 = vld [vmem:[#allocation7 + $0xe0] sm:$0xff]
    %v505 = vld [vmem:[#allocation7 + $0xe8] sm:$0xff]
    %v506 = vld [vmem:[#allocation7 + $0xf0] sm:$0xff]
    %v507 = vld [vmem:[#allocation7 + $0xf8] sm:$0xff]
    %v508 = vld [vmem:[#allocation7 + $0x100] sm:$0xff]
    %v509 = vld [vmem:[#allocation7 + $0x108] sm:$0xff]
    %v510 = vld [vmem:[#allocation7 + $0x110] sm:$0xff]
    %v511 = vld [vmem:[#allocation7 + $0x118] sm:$0xff]
    %v512 = vld [vmem:[#allocation7 + $0x120] sm:$0xff]
    %v513 = vld [vmem:[#allocation7 + $0x128] sm:$0xff]
    %v514 = vld [vmem:[#allocation7 + $0x130] sm:$0xff]
    %v515 = vld [vmem:[#allocation7 + $0x138] sm:$0xff]
    %v516 = vld [vmem:[#allocation7 + $0x140] sm:$0xff]
    %v517 = vld [vmem:[#allocation7 + $0x148] sm:$0xff]
    %v518 = vld [vmem:[#allocation7 + $0x150] sm:$0xff]
    %v519 = vld [vmem:[#allocation7 + $0x158] sm:$0xff]
    %v520 = vld [vmem:[#allocation7 + $0x160] sm:$0xff]
    %v521 = vld [vmem:[#allocation7 + $0x168] sm:$0xff]
    %v522 = vld [vmem:[#allocation7 + $0x170] sm:$0xff]
    %v523 = vld [vmem:[#allocation7 + $0x178] sm:$0xff]
    %v524 = vld [vmem:[#allocation7 + $0x180] sm:$0xff]
    %v525 = vld [vmem:[#allocation7 + $0x188] sm:$0xff]
    %v526 = vld [vmem:[#allocation7 + $0x190] sm:$0xff]
    %v527 = vld [vmem:[#allocation7 + $0x198] sm:$0xff]
    %v528 = vld [vmem:[#allocation7 + $0x1a0] sm:$0xff]
    %v529 = vld [vmem:[#allocation7 + $0x1a8] sm:$0xff]
    %v530 = vld [vmem:[#allocation7 + $0x1b0] sm:$0xff]
    %v531 = vld [vmem:[#allocation7 + $0x1b8] sm:$0xff]
    %v532 = vld [vmem:[#allocation7 + $0x1c0] sm:$0xff]
    %v533 = vld [vmem:[#allocation7 + $0x1c8] sm:$0xff]
    %v534 = vld [vmem:[#allocation7 + $0x1d0] sm:$0xff]
    %v535 = vld [vmem:[#allocation7 + $0x1d8] sm:$0xff]
    %v536 = vld [vmem:[#allocation7 + $0x1e0] sm:$0xff]
    %v537 = vld [vmem:[#allocation7 + $0x1e8] sm:$0xff]
    %v538 = vld [vmem:[#allocation7 + $0x1f0] sm:$0xff]
    %v539 = vld [vmem:[#allocation7 + $0x1f8] sm:$0xff]
    %v541 = vlaneseq
    %v542 = vshrl.u32 %v541, 7
    %v543 = vsub.s32 0, %v542
    %v544 = vrot.slane %v76, %v543
    %v545 = vlaneseq
    %v546 = vshrl.u32 %v545, 7
    %v547 = vsub.s32 1, %v546
    %v548 = vrot.slane %v76, %v547
    %v615 = vunpack.c.l.b16 %v476
    %v616 = vunpack.c.h.b16 %v476
    %v617 = vunpack.c.l.b16 %v477
    %v618 = vunpack.c.h.b16 %v477
    %v619 = vunpack.c.l.b16 %v478
    %v620 = vunpack.c.h.b16 %v478
    %v621 = vunpack.c.l.b16 %v479
    %v622 = vunpack.c.h.b16 %v479
    %v623 = vunpack.c.l.b16 %v480
    %v624 = vunpack.c.h.b16 %v480
    %v625 = vunpack.c.l.b16 %v481
    %v626 = vunpack.c.h.b16 %v481
    %v627 = vunpack.c.l.b16 %v482
    %v628 = vunpack.c.h.b16 %v482
    %v629 = vunpack.c.l.b16 %v483
    %v630 = vunpack.c.h.b16 %v483
    %v631 = vunpack.c.l.b16 %v484
    %v632 = vunpack.c.h.b16 %v484
    %v633 = vunpack.c.l.b16 %v485
    %v634 = vunpack.c.h.b16 %v485
    %v635 = vunpack.c.l.b16 %v486
    %v636 = vunpack.c.h.b16 %v486
    %v637 = vunpack.c.l.b16 %v487
    %v638 = vunpack.c.h.b16 %v487
    %v639 = vunpack.c.l.b16 %v488
    %v640 = vunpack.c.h.b16 %v488
    %v641 = vunpack.c.l.b16 %v489
    %v642 = vunpack.c.h.b16 %v489
    %v643 = vunpack.c.l.b16 %v490
    %v644 = vunpack.c.h.b16 %v490
    %v645 = vunpack.c.l.b16 %v491
    %v646 = vunpack.c.h.b16 %v491
    %v647 = vunpack.c.l.b16 %v492
    %v648 = vunpack.c.h.b16 %v492
    %v649 = vunpack.c.l.b16 %v493
    %v650 = vunpack.c.h.b16 %v493
    %v651 = vunpack.c.l.b16 %v494
    %v652 = vunpack.c.h.b16 %v494
    %v653 = vunpack.c.l.b16 %v495
    %v654 = vunpack.c.h.b16 %v495
    %v655 = vunpack.c.l.b16 %v496
    %v656 = vunpack.c.h.b16 %v496
    %v657 = vunpack.c.l.b16 %v497
    %v658 = vunpack.c.h.b16 %v497
    %v659 = vunpack.c.l.b16 %v498
    %v660 = vunpack.c.h.b16 %v498
    %v661 = vunpack.c.l.b16 %v499
    %v662 = vunpack.c.h.b16 %v499
    %v663 = vunpack.c.l.b16 %v500
    %v664 = vunpack.c.h.b16 %v500
    %v665 = vunpack.c.l.b16 %v501
    %v666 = vunpack.c.h.b16 %v501
    %v667 = vunpack.c.l.b16 %v502
    %v668 = vunpack.c.h.b16 %v502
    %v669 = vunpack.c.l.b16 %v503
    %v670 = vunpack.c.h.b16 %v503
    %v671 = vunpack.c.l.b16 %v504
    %v672 = vunpack.c.h.b16 %v504
    %v673 = vunpack.c.l.b16 %v505
    %v674 = vunpack.c.h.b16 %v505
    %v675 = vunpack.c.l.b16 %v506
    %v676 = vunpack.c.h.b16 %v506
    %v677 = vunpack.c.l.b16 %v507
    %v678 = vunpack.c.h.b16 %v507
    %v679 = vunpack.c.l.b16 %v508
    %v680 = vunpack.c.h.b16 %v508
    %v681 = vunpack.c.l.b16 %v509
    %v682 = vunpack.c.h.b16 %v509
    %v683 = vunpack.c.l.b16 %v510
    %v684 = vunpack.c.h.b16 %v510
    %v685 = vunpack.c.l.b16 %v511
    %v686 = vunpack.c.h.b16 %v511
    %v687 = vunpack.c.l.b16 %v512
    %v688 = vunpack.c.h.b16 %v512
    %v689 = vunpack.c.l.b16 %v513
    %v690 = vunpack.c.h.b16 %v513
    %v691 = vunpack.c.l.b16 %v514
    %v692 = vunpack.c.h.b16 %v514
    %v693 = vunpack.c.l.b16 %v515
    %v694 = vunpack.c.h.b16 %v515
    %v695 = vunpack.c.l.b16 %v516
    %v696 = vunpack.c.h.b16 %v516
    %v697 = vunpack.c.l.b16 %v517
    %v698 = vunpack.c.h.b16 %v517
    %v699 = vunpack.c.l.b16 %v518
    %v700 = vunpack.c.h.b16 %v518
    %v701 = vunpack.c.l.b16 %v519
    %v702 = vunpack.c.h.b16 %v519
    %v703 = vunpack.c.l.b16 %v520
    %v704 = vunpack.c.h.b16 %v520
    %v705 = vunpack.c.l.b16 %v521
    %v706 = vunpack.c.h.b16 %v521
    %v707 = vunpack.c.l.b16 %v522
    %v708 = vunpack.c.h.b16 %v522
    %v709 = vunpack.c.l.b16 %v523
    %v710 = vunpack.c.h.b16 %v523
    %v711 = vunpack.c.l.b16 %v524
    %v712 = vunpack.c.h.b16 %v524
    %v713 = vunpack.c.l.b16 %v525
    %v714 = vunpack.c.h.b16 %v525
    %v715 = vunpack.c.l.b16 %v526
    %v716 = vunpack.c.h.b16 %v526
    %v717 = vunpack.c.l.b16 %v527
    %v718 = vunpack.c.h.b16 %v527
    %v719 = vunpack.c.l.b16 %v528
    %v720 = vunpack.c.h.b16 %v528
    %v721 = vunpack.c.l.b16 %v529
    %v722 = vunpack.c.h.b16 %v529
    %v723 = vunpack.c.l.b16 %v530
    %v724 = vunpack.c.h.b16 %v530
    %v725 = vunpack.c.l.b16 %v531
    %v726 = vunpack.c.h.b16 %v531
    %v727 = vunpack.c.l.b16 %v532
    %v728 = vunpack.c.h.b16 %v532
    %v729 = vunpack.c.l.b16 %v533
    %v730 = vunpack.c.h.b16 %v533
    %v731 = vunpack.c.l.b16 %v534
    %v732 = vunpack.c.h.b16 %v534
    %v733 = vunpack.c.l.b16 %v535
    %v734 = vunpack.c.h.b16 %v535
    %v735 = vunpack.c.l.b16 %v536
    %v736 = vunpack.c.h.b16 %v536
    %v737 = vunpack.c.l.b16 %v537
    %v738 = vunpack.c.h.b16 %v537
    %v739 = vunpack.c.l.b16 %v538
    %v740 = vunpack.c.h.b16 %v538
    %v741 = vunpack.c.l.b16 %v539
    %v742 = vunpack.c.h.b16 %v539
    %v743 = vpack.c.b16 %v617, %v615
    %v744 = vpack.c.b16 %v618, %v616
    %v745 = vpack.c.b16 %v621, %v619
    %v746 = vpack.c.b16 %v622, %v620
    %v747 = vpack.c.b16 %v625, %v623
    %v748 = vpack.c.b16 %v626, %v624
    %v749 = vpack.c.b16 %v629, %v627
    %v750 = vpack.c.b16 %v630, %v628
    %v751 = vpack.c.b16 %v633, %v631
    %v752 = vpack.c.b16 %v634, %v632
    %v753 = vpack.c.b16 %v637, %v635
    %v754 = vpack.c.b16 %v638, %v636
    %v755 = vpack.c.b16 %v641, %v639
    %v756 = vpack.c.b16 %v642, %v640
    %v757 = vpack.c.b16 %v645, %v643
    %v758 = vpack.c.b16 %v646, %v644
    %v759 = vpack.c.b16 %v649, %v647
    %v760 = vpack.c.b16 %v650, %v648
    %v761 = vpack.c.b16 %v653, %v651
    %v762 = vpack.c.b16 %v654, %v652
    %v763 = vpack.c.b16 %v657, %v655
    %v764 = vpack.c.b16 %v658, %v656
    %v765 = vpack.c.b16 %v661, %v659
    %v766 = vpack.c.b16 %v662, %v660
    %v767 = vpack.c.b16 %v665, %v663
    %v768 = vpack.c.b16 %v666, %v664
    %v769 = vpack.c.b16 %v669, %v667
    %v770 = vpack.c.b16 %v670, %v668
    %v771 = vpack.c.b16 %v673, %v671
    %v772 = vpack.c.b16 %v674, %v672
    %v773 = vpack.c.b16 %v677, %v675
    %v774 = vpack.c.b16 %v678, %v676
    %v775 = vpack.c.b16 %v681, %v679
    %v776 = vpack.c.b16 %v682, %v680
    %v777 = vpack.c.b16 %v685, %v683
    %v778 = vpack.c.b16 %v686, %v684
    %v779 = vpack.c.b16 %v689, %v687
    %v780 = vpack.c.b16 %v690, %v688
    %v781 = vpack.c.b16 %v693, %v691
    %v782 = vpack.c.b16 %v694, %v692
    %v783 = vpack.c.b16 %v697, %v695
    %v784 = vpack.c.b16 %v698, %v696
    %v785 = vpack.c.b16 %v701, %v699
    %v786 = vpack.c.b16 %v702, %v700
    %v787 = vpack.c.b16 %v705, %v703
    %v788 = vpack.c.b16 %v706, %v704
    %v789 = vpack.c.b16 %v709, %v707
    %v790 = vpack.c.b16 %v710, %v708
    %v791 = vpack.c.b16 %v713, %v711
    %v792 = vpack.c.b16 %v714, %v712
    %v793 = vpack.c.b16 %v717, %v715
    %v794 = vpack.c.b16 %v718, %v716
    %v795 = vpack.c.b16 %v721, %v719
    %v796 = vpack.c.b16 %v722, %v720
    %v797 = vpack.c.b16 %v725, %v723
    %v798 = vpack.c.b16 %v726, %v724
    %v799 = vpack.c.b16 %v729, %v727
    %v800 = vpack.c.b16 %v730, %v728
    %v801 = vpack.c.b16 %v733, %v731
    %v802 = vpack.c.b16 %v734, %v732
    %v803 = vpack.c.b16 %v737, %v735
    %v804 = vpack.c.b16 %v738, %v736
    %v805 = vpack.c.b16 %v741, %v739
    %v806 = vpack.c.b16 %v742, %v740
    %871 = vmatprep.subr.bf16.mxu0 %v744
    %872 = vmatpush1.bf16.msra.mxu0 %v743
    %873 = vmatprep.subr.bf16.mxu0 %v746
    %874 = vmatpush1.bf16.msra.mxu0 %v745
    %875 = vmatprep.subr.bf16.mxu0 %v748
    %876 = vmatpush1.bf16.msra.mxu0 %v747
    %877 = vmatprep.subr.bf16.mxu0 %v750
    %878 = vmatpush1.bf16.msra.mxu0 %v749
    %879 = vmatprep.subr.bf16.mxu0 %v752
    %880 = vmatpush1.bf16.msra.mxu0 %v751
    %881 = vmatprep.subr.bf16.mxu0 %v754
    %882 = vmatpush1.bf16.msra.mxu0 %v753
    %883 = vmatprep.subr.bf16.mxu0 %v756
    %884 = vmatpush1.bf16.msra.mxu0 %v755
    %885 = vmatprep.subr.bf16.mxu0 %v758
    %886 = vmatpush1.bf16.msra.mxu0 %v757
    %887 = vmatprep.subr.bf16.mxu0 %v760
    %888 = vmatpush1.bf16.msra.mxu0 %v759
    %889 = vmatprep.subr.bf16.mxu0 %v762
    %890 = vmatpush1.bf16.msra.mxu0 %v761
    %891 = vmatprep.subr.bf16.mxu0 %v764
    %892 = vmatpush1.bf16.msra.mxu0 %v763
    %893 = vmatprep.subr.bf16.mxu0 %v766
    %894 = vmatpush1.bf16.msra.mxu0 %v765
    %895 = vmatprep.subr.bf16.mxu0 %v768
    %896 = vmatpush1.bf16.msra.mxu0 %v767
    %897 = vmatprep.subr.bf16.mxu0 %v770
    %898 = vmatpush1.bf16.msra.mxu0 %v769
    %899 = vmatprep.subr.bf16.mxu0 %v772
    %900 = vmatpush1.bf16.msra.mxu0 %v771
    %901 = vmatprep.subr.bf16.mxu0 %v774
    %902 = vmatpush1.bf16.msra.mxu0 %v773
    %903 = vmatprep.mubr.bf16.mxu0 %v473
    %904 = vmatmul.mubr.bf16.gmra.mrb[0].mxu0 %v472
    %v905 = vpop.f32.mrb[0].mxu0
    %v906 = vadd.f32 %v544, %v905
    %v907 = vpop.f32.mrb[0].mxu0
    %v908 = vadd.f32 %v548, %v907
    %v909 = vpop.f32.mrb[0].mxu0
    %v910 = vpop.f32.mrb[0].mxu0
    %911 = vdwg.mxu0
    %912 = vmatprep.subr.bf16.mxu0 %v776
    %913 = vmatpush1.bf16.msra.mxu0 %v775
    %914 = vmatprep.subr.bf16.mxu0 %v778
    %915 = vmatpush1.bf16.msra.mxu0 %v777
    %916 = vmatprep.subr.bf16.mxu0 %v780
    %917 = vmatpush1.bf16.msra.mxu0 %v779
    %918 = vmatprep.subr.bf16.mxu0 %v782
    %919 = vmatpush1.bf16.msra.mxu0 %v781
    %920 = vmatprep.subr.bf16.mxu0 %v784
    %921 = vmatpush1.bf16.msra.mxu0 %v783
    %922 = vmatprep.subr.bf16.mxu0 %v786
    %923 = vmatpush1.bf16.msra.mxu0 %v785
    %924 = vmatprep.subr.bf16.mxu0 %v788
    %925 = vmatpush1.bf16.msra.mxu0 %v787
    %926 = vmatprep.subr.bf16.mxu0 %v790
    %927 = vmatpush1.bf16.msra.mxu0 %v789
    %928 = vmatprep.subr.bf16.mxu0 %v792
    %929 = vmatpush1.bf16.msra.mxu0 %v791
    %930 = vmatprep.subr.bf16.mxu0 %v794
    %931 = vmatpush1.bf16.msra.mxu0 %v793
    %932 = vmatprep.subr.bf16.mxu0 %v796
    %933 = vmatpush1.bf16.msra.mxu0 %v795
    %934 = vmatprep.subr.bf16.mxu0 %v798
    %935 = vmatpush1.bf16.msra.mxu0 %v797
    %936 = vmatprep.subr.bf16.mxu0 %v800
    %937 = vmatpush1.bf16.msra.mxu0 %v799
    %938 = vmatprep.subr.bf16.mxu0 %v802
    %939 = vmatpush1.bf16.msra.mxu0 %v801
    %940 = vmatprep.subr.bf16.mxu0 %v804
    %941 = vmatpush1.bf16.msra.mxu0 %v803
    %942 = vmatprep.subr.bf16.mxu0 %v806
    %943 = vmatpush1.bf16.msra.mxu0 %v805
    %944 = vmatprep.mubr.bf16.mxu0 %v475
    %945 = vmatmul.mubr.bf16.gmra.mrb[0].mxu0 %v474
    %v946 = vpop.f32.mrb[0].mxu0
    %v947 = vadd.f32 %v906, %v946
    %v948 = vpop.f32.mrb[0].mxu0
    %v949 = vadd.f32 %v908, %v948
    %v950 = vpop.f32.mrb[0].mxu0
    %v951 = vpop.f32.mrb[0].mxu0
    %952 = vdwg.mxu0
    %v953 = vmul.f32 %v947, 0.5
    %v954 = vmul.f32 %v949, 0.5
    %v955 = vtanh.pop %v953
    %v956 = vtanh.pop %v954
    %v957 = vmul.f32 %v955, 0.5
    %v958 = vmul.f32 %v956, 0.5
    %v959 = vadd.f32 %v957, 0.5
    %v960 = vadd.f32 %v958, 0.5
    %v961 = vadd.f32 %v959, %v960
    %962 = vadd.xlane.f32.xlu0 %v961
    %v963 = vpop.xlane.xlu0 %962
    %v964 = vmul.f32 %v959, %v959
    %v965 = vmul.f32 %v960, %v960
    %v966 = vadd.f32 %v964, %v965
    %967 = vadd.xlane.f32.xlu0 %v966
    %v968 = vpop.xlane.xlu0 %967
    %v969 = vmul.f32 %v963, 0.00390625
    %v970 = vmul.f32 %v968, 0.00390625
    %v971 = vmul.f32 %v969, %v969
    %v972 = vsub.f32 %v970, %v971
    %v973 = vmax.f32 %v972, 0.0
    %v974 = vsub.f32 %v959, %v969
    %v975 = vsub.f32 %v960, %v969
    %v976 = vadd.f32 %v973, 1e-05
    %v977 = vrsqrt.pop %v976
    %v978 = vmul.f32 %v974, %v977
    %v979 = vmul.f32 %v975, %v977
    %v981 = vlaneseq
    %v982 = vshrl.u32 %v981, 7
    %v983 = vsub.s32 0, %v982
    %v984 = vrot.slane %v78, %v983
    %v985 = vlaneseq
    %v986 = vshrl.u32 %v985, 7
    %v987 = vsub.s32 1, %v986
    %v988 = vrot.slane %v78, %v987
    %v991 = vpack.c.bf16 %v984, %v984
    %v992 = vpack.c.bf16 %v988, %v988
    %v993 = vpack.c.bf16 %v978, %v978
    %v994 = vpack.c.bf16 %v979, %v979
    %996 = vset.pattern.permute.xlu0 0
    %997 = vperm.xlu0 %996, %v79
    %v998 = vpop.permute.xlu0 %997
    %1000 = vmatprep.subr.bf16.mxu0 %v994
    %1001 = vmatpush1.bf16.xpose.msra.mxu0 %v993
    %1002 = vmatprep.subr.bf16.mxu0 0
    %1003 = vmatpush1.bf16.xpose.msra.mxu0 0
    %1004 = vmatprep.subr.bf16.mxu0 0
    %1005 = vmatpush1.bf16.xpose.msra.mxu0 0
    %1006 = vmatprep.subr.bf16.mxu0 0
    %1007 = vmatpush1.bf16.xpose.msra.mxu0 0
    %1008 = vmatprep.subr.bf16.mxu0 0
    %1009 = vmatpush1.bf16.xpose.msra.mxu0 0
    %1010 = vmatprep.subr.bf16.mxu0 0
    %1011 = vmatpush1.bf16.xpose.msra.mxu0 0
    %1012 = vmatprep.subr.bf16.mxu0 0
    %1013 = vmatpush1.bf16.xpose.msra.mxu0 0
    %1014 = vmatprep.subr.bf16.mxu0 0
    %1015 = vmatpush1.bf16.xpose.msra.mxu0 0
    %1016 = vmatprep.subr.bf16.mxu0 0
    %1017 = vmatpush1.bf16.xpose.msra.mxu0 0
    %1018 = vmatprep.subr.bf16.mxu0 0
    %1019 = vmatpush1.bf16.xpose.msra.mxu0 0
    %1020 = vmatprep.subr.bf16.mxu0 0
    %1021 = vmatpush1.bf16.xpose.msra.mxu0 0
    %1022 = vmatprep.subr.bf16.mxu0 0
    %1023 = vmatpush1.bf16.xpose.msra.mxu0 0
    %1024 = vmatprep.subr.bf16.mxu0 0
    %1025 = vmatpush1.bf16.xpose.msra.mxu0 0
    %1026 = vmatprep.subr.bf16.mxu0 0
    %1027 = vmatpush1.bf16.xpose.msra.mxu0 0
    %1028 = vmatprep.subr.bf16.mxu0 0
    %1029 = vmatpush1.bf16.xpose.msra.mxu0 0
    %1030 = vmatprep.subr.bf16.mxu0 0
    %1031 = vmatpush1.bf16.xpose.msra.mxu0 0
    %1032 = vmatprep.mubr.bf16.mxu0 %v992
    %1033 = vmatmul.mubr.bf16.gmra.mrb[0].mxu0 %v991
    %v1034 = vpop.f32.mrb[0].mxu0
    %v1035 = vadd.f32 %v998, %v1034
    %v1036 = vpop.f32.mrb[0].mxu0
    %v1037 = vpop.f32.mrb[0].mxu0
    %v1038 = vpop.f32.mrb[0].mxu0
    %1039 = vdwg.mxu0
    %vm1040 = vcmask 57344
    %1041 = vst.msk [vmem:[#allocation10] sm:$0x1] %vm1040, %v1035
    // Predicated region
    $region34: #{mlp2_fixed_hidden_sigmoid.1} parent=1 // pred_check
      _
    $region35: #{mlp2_fixed_hidden_sigmoid.1} parent=1 // pred_check_branch
      %1043 = sbr.rel (0) target = $region37
    $region36: #{mlp2_fixed_hidden_sigmoid.1} parent=1 // pred_region
      %s1045 = ssub.s32 16, 16
      %1046 = vsyncadd [#allocation4], %s1045
      %s1048 = sshll.u32 [#allocation10], 4
      %s1049 = int_to_ptr.vmem [resolvable:$true] %s1048
      %1051 = dma.vmem_to_hbm [thread:$0]  %s1049, 16, %s4, [#allocation4]
    $region37: #{mlp2_fixed_hidden_sigmoid.1} parent=1 // pred_fallthru
      _
    // Predicated region
    $region38: #{mlp2_fixed_hidden_sigmoid.1} parent=1 // pred_check
      _
    $region39: #{mlp2_fixed_hidden_sigmoid.1} parent=1 // pred_check_branch
      %1053 = sbr.rel (0) target = $region41
    $region40: #{mlp2_fixed_hidden_sigmoid.1} parent=1 // pred_region
      %1054 = dma.done [#allocation4], 16
    $region41: #{mlp2_fixed_hidden_sigmoid.1} parent=1 // pred_fallthru
      _
    %1055 = vsyncpa [#allocation3], 1
    %1056 = vsyncpa [#allocation6], 1
    %1057 = vsyncpa [#allocation9], 1
    %1058 = vsyncpa [#allocation4], 1

</llo_original>
